<compile_context>
chip_gen: v6e
topology: v6e:2x2x1
jax: 0.10.0
libtpu: 0.0.40
codegen_flags: <defaults>
</compile_context>

<pallas_src>
import functools

import jax
import jax.numpy as jnp
from jax.experimental import pallas as pl
from jax.experimental.pallas import tpu as pltpu

_COS_EPS = 1e-8     # PyTorch F.cosine_similarity default eps
_CLAMP_MIN = 1e-6   # .clamp(min=1e-06) in the reference forward


def _rank_loss_kernel(margin_ref, nl_pos_ref, nl_neg_ref, code_pos_ref,
                      o_ref, acc_ref, *, batch, block_rows, tiles_per_part,
                      mask_rows):
    c = pl.program_id(0)   # TensorCore partition
    i = pl.program_id(1)   # row tile within the partition

    @pl.when(i == 0)
    def _init():
        acc_ref[...] = jnp.zeros_like(acc_ref)

    # Upcast per tile inside the kernel; HBM traffic stays in the source dtype.
    nl_pos = nl_pos_ref[...].astype(jnp.float32)
    nl_neg = nl_neg_ref[...].astype(jnp.float32)
    code_pos = code_pos_ref[...].astype(jnp.float32)

    # Per-row dot products and sums of squares (reduce along the feature axis).
    dot_pp = jnp.sum(nl_pos * code_pos, axis=-1, keepdims=True)   # (TB, 1)
    dot_np = jnp.sum(nl_neg * code_pos, axis=-1, keepdims=True)
    ss_p = jnp.sum(nl_pos * nl_pos, axis=-1, keepdims=True)
    ss_n = jnp.sum(nl_neg * nl_neg, axis=-1, keepdims=True)
    ss_c = jnp.sum(code_pos * code_pos, axis=-1, keepdims=True)

    # 1 / max(||x||, eps) == rsqrt(max(||x||^2, eps^2)).  Clamping each operand
    # separately matches PyTorch's cosine_similarity and cannot overflow f32 the way
    # ||a||^2 * ||b||^2 can.  rsqrt runs on the EUP (free slot on a mem-bound kernel).
    eps_sq = jnp.float32(_COS_EPS) * jnp.float32(_COS_EPS)
    inv_p = jax.lax.rsqrt(jnp.maximum(ss_p, eps_sq))
    inv_n = jax.lax.rsqrt(jnp.maximum(ss_n, eps_sq))
    inv_c = jax.lax.rsqrt(jnp.maximum(ss_c, eps_sq))
    cos_pos = dot_pp * (inv_p * inv_c)
    cos_neg = dot_np * (inv_n * inv_c)

    margin = margin_ref[0, 0]
    per_row = jnp.maximum(margin - cos_pos + cos_neg, jnp.float32(_CLAMP_MIN))

    if mask_rows:
        # Mask rows of the padded-tail tile and of redundant (clamped) tiles using the
        # *logical* tile id, so garbage / re-read rows contribute exactly zero.
        row_start = (c * tiles_per_part + i) * block_rows
        row_ids = row_start + jax.lax.broadcasted_iota(jnp.int32, per_row.shape, 0)
        per_row = jnp.where(row_ids < batch, per_row, jnp.float32(0.0))

    # Per-step: only a VALU add into a persistent VMEM vector accumulator.
    acc_ref[...] += per_row

    @pl.when(i == pl.num_programs(1) - 1)
    def _finalize():
        # Single cross-sublane reduce per partition; broadcast into a dense output tile.
        partial = jnp.sum(acc_ref[...])
        o_ref[...] = jnp.broadcast_to(partial, o_ref.shape).astype(o_ref.dtype)


def _vmem_capacity_bytes():
    try:
        return int(pltpu.get_tpu_info().vmem_capacity_bytes)
    except Exception:
        return 64 * 1024 * 1024   # assume the smallest generation (v7x) if unknown


def _num_tensorcore_partitions():
    try:
        info = pltpu.get_tpu_info()
        for name in ("num_cores", "core_count", "num_tensorcores", "tensorcore_count"):
            val = getattr(info, name, None)
            if val is None:
                continue
            try:
                val = int(val)
            except (TypeError, ValueError):
                continue
            if val >= 1:
                return max(1, min(val, 8))
    except Exception:
        pass
    # 2 partitions is harmless on 1-TC chips (at most one redundant, fully-masked tile)
    # and captures both cores when the runtime shards the "parallel" axis.
    return 2


def _choose_block_rows(batch, feat, dtype, target_bytes):
    itemsize = jnp.dtype(dtype).itemsize
    align = 8 * max(1, 4 // itemsize)      # 8 for f32, 16 for bf16, 32 for int8/fp8
    elem_bytes = max(4, itemsize)          # size by the f32 footprint after upcast
    rows = target_bytes // max(1, feat * elem_bytes)
    if rows >= batch:
        return batch                       # one tile covers the whole batch
    return int(max(align, (rows // align) * align))


def rank_loss(nl_vec_pos, nl_vec_neg, code_vec_pos, code_vec_neg, *, margin,
              block_rows=None):
    """Pallas implementation of RankLoss.forward.

    code_vec_neg is accepted to mirror the PyTorch signature but is unused by the
    reference forward pass.
    """
    del code_vec_neg  # unused by the reference module's forward
    B, D = nl_vec_pos.shape
    assert nl_vec_neg.shape == (B, D) and code_vec_pos.shape == (B, D)

    # Lane-dense layout: zero-pad the feature axis to a multiple of 128 (zero padding is
    # exactly correct for the dot products and sums of squares).
    if D % 128 != 0:
        pad = ((0, 0), (0, 128 - D % 128))
        nl_vec_pos = jnp.pad(nl_vec_pos, pad)
        nl_vec_neg = jnp.pad(nl_vec_neg, pad)
        code_vec_pos = jnp.pad(code_vec_pos, pad)
        D = nl_vec_pos.shape[1]

    # Generation-aware tiling: small blocks + tight scoped-VMEM limit on 64 MiB parts
    # (v7x); large blocks + generous limit on 128 MiB parts (v5e/v6e).
    vmem_cap = _vmem_capacity_bytes()
    if vmem_cap <= 64 * 1024 * 1024:
        target_block_bytes = 2 * 1024 * 1024
        vmem_limit = 48 * 1024 * 1024
    else:
        target_block_bytes = 8 * 1024 * 1024
        vmem_limit = 96 * 1024 * 1024

    if block_rows is None:
        block_rows = _choose_block_rows(B, D, nl_vec_pos.dtype, target_block_bytes)

    total_tiles = int(pl.cdiv(B, block_rows))
    num_parts = _num_tensorcore_partitions()
    tiles_per_part = int(pl.cdiv(total_tiles, num_parts))
    num_parts = int(pl.cdiv(total_tiles, tiles_per_part))   # drop empty partitions

    # Trace-time check: only emit the row mask when the tiling doesn't cover B exactly.
    mask_rows = (num_parts * tiles_per_part * block_rows) != B

    last_tile = total_tiles - 1
    if num_parts * tiles_per_part == total_tiles:
        def row_index_map(c, i):
            return (c * tiles_per_part + i, 0)
    else:
        def row_index_map(c, i):
            # Clamp the redundant trailing tiles of the last partition onto the last
            # real tile; their rows are fully masked inside the kernel.
            return (jnp.minimum(c * tiles_per_part + i, last_tile), 0)

    kernel = functools.partial(
        _rank_loss_kernel, batch=B, block_rows=block_rows,
        tiles_per_part=tiles_per_part, mask_rows=mask_rows)

    # margin as a runtime SMEM scalar -> no recompile when it changes.
    margin_arr = jnp.asarray(margin, dtype=jnp.float32).reshape(1, 1)

    row_spec = pl.BlockSpec((block_rows, D), row_index_map)
    smem_scalar_spec = pl.BlockSpec(memory_space=pltpu.MemorySpace.SMEM)

    partials = pl.pallas_call(
        kernel,
        out_shape=jax.ShapeDtypeStruct((num_parts, 8, 128), jnp.float32),
        grid=(num_parts, tiles_per_part),
        in_specs=[
            smem_scalar_spec,             # margin (SMEM scalar, resident)
            row_spec, row_spec, row_spec,
        ],
        out_specs=pl.BlockSpec((1, 8, 128), lambda c, i: (c, 0, 0)),
        scratch_shapes=[pltpu.VMEM((block_rows, 1), jnp.float32)],
        compiler_params=pltpu.CompilerParams(
            dimension_semantics=("parallel", "arbitrary"),
            vmem_limit_bytes=vmem_limit,
        ),
    )(margin_arr, nl_vec_pos, nl_vec_neg, code_vec_pos)

    # Combine the per-partition partial sums and divide by the true batch size.
    return jnp.sum(partials[:, 0, 0]) / jnp.float32(B)


def _rank_loss_ref(nl_vec_pos, nl_vec_neg, code_vec_pos, margin):
    """Pure-JAX reference mirroring PyTorch F.cosine_similarity semantics."""
    def cos(a, b):
        na = jnp.maximum(jnp.linalg.norm(a, axis=1), _COS_EPS)
        nb = jnp.maximum(jnp.linalg.norm(b, axis=1), _COS_EPS)
        return jnp.sum(a * b, axis=1) / (na * nb)

    loss = margin - cos(nl_vec_pos, code_vec_pos) + cos(nl_vec_neg, code_vec_pos)
    return jnp.mean(jnp.maximum(loss, _CLAMP_MIN))


if __name__ == "__main__":
    # Deterministic synthetic inputs; RankLoss has no learned parameters,
    # only the `margin` hyper-parameter from __init__.
    margin = 0.5
    B, D = 8, 128  # batch of vector pairs, hidden dim

    key = jax.random.PRNGKey(0)
    k1, k2, k3, k4 = jax.random.split(key, 4)
    nl_vec_pos = jax.random.normal(k1, (B, D), dtype=jnp.float32)
    nl_vec_neg = jax.random.normal(k2, (B, D), dtype=jnp.float32)
    code_vec_pos = jax.random.normal(k3, (B, D), dtype=jnp.float32)
    code_vec_neg = jax.random.normal(k4, (B, D), dtype=jnp.float32)

    out = rank_loss(nl_vec_pos, nl_vec_neg, code_vec_pos, code_vec_neg,
                    margin=margin)
    out = jax.block_until_ready(out)

    ref = _rank_loss_ref(nl_vec_pos, nl_vec_neg, code_vec_pos, margin)
    assert jnp.allclose(out, ref, rtol=2e-5, atol=1e-5), (out, ref)

    print("KERNEL_OK")
</pallas_src>

<mosaic_0001>
module attributes {stable_mosaic.version = 11 : i64} {
  func.func @_rank_loss_kernel(%arg0: i32, %arg1: i32, %arg2: memref<1x1xf32, #tpu.memory_space<smem>>, %arg3: memref<8x128xf32, #tpu.memory_space<vmem>>, %arg4: memref<8x128xf32, #tpu.memory_space<vmem>>, %arg5: memref<8x128xf32, #tpu.memory_space<vmem>>, %arg6: memref<1x8x128xf32, #tpu.memory_space<vmem>>, %arg7: memref<8x1xf32, #tpu.memory_space<vmem>>) attributes {dimension_semantics = [#tpu.dimension_semantics<parallel>, #tpu.dimension_semantics<arbitrary>], iteration_bounds = array<i64: 1, 1>, scalar_prefetch = 0 : i64, scratch_operands = 1 : i64, tpu.core_type = #tpu.core_type<tc>, window_params = [{transform_indices = @transform_0, window_bounds = array<i64: 1, 1>}, {transform_indices = @transform_1, window_bounds = array<i64: 8, 128>}, {transform_indices = @transform_2, window_bounds = array<i64: 8, 128>}, {transform_indices = @transform_3, window_bounds = array<i64: 8, 128>}, {transform_indices = @transform_4, window_bounds = array<i64: 1, 8, 128>}]} {
    %c0_i32 = arith.constant 0 : i32
    %0 = arith.cmpi eq, %arg1, %c0_i32 : i32
    %1 = arith.extui %0 : i1 to i32
    %c0_i32_0 = arith.constant 0 : i32
    %2 = arith.cmpi ne, %1, %c0_i32_0 : i32
    scf.if %2 {
      %cst_21 = arith.constant 0.000000e+00 : f32
      %47 = vector.broadcast %cst_21 : f32 to vector<8x1xf32>
      %c0_22 = arith.constant 0 : index
      %c0_23 = arith.constant 0 : index
      %48 = vector.load %arg7[%c0_22, %c0_23] : memref<8x1xf32, #tpu.memory_space<vmem>>, vector<8x1xf32>
      tpu.vector_store %arg7[%c0_22, %c0_23], %47 {strides = array<i32>} : memref<8x1xf32, #tpu.memory_space<vmem>>, vector<8x1xf32>,
    } else {
    }
    %c0 = arith.constant 0 : index
    %c0_1 = arith.constant 0 : index
    %3 = vector.load %arg3[%c0, %c0_1] : memref<8x128xf32, #tpu.memory_space<vmem>>, vector<8x128xf32>
    %c0_2 = arith.constant 0 : index
    %c0_3 = arith.constant 0 : index
    %4 = vector.load %arg4[%c0_2, %c0_3] : memref<8x128xf32, #tpu.memory_space<vmem>>, vector<8x128xf32>
    %c0_4 = arith.constant 0 : index
    %c0_5 = arith.constant 0 : index
    %5 = vector.load %arg5[%c0_4, %c0_5] : memref<8x128xf32, #tpu.memory_space<vmem>>, vector<8x128xf32>
    %6 = arith.mulf %3, %5 : vector<8x128xf32>
    %cst = arith.constant dense<0.000000e+00> : vector<8xf32>
    %7 = vector.multi_reduction <add>, %6, %cst [1] : vector<8x128xf32> to vector<8xf32>
    %8 = vector.shape_cast %7 : vector<8xf32> to vector<8x1xf32>
    %9 = arith.mulf %4, %5 : vector<8x128xf32>
    %cst_6 = arith.constant dense<0.000000e+00> : vector<8xf32>
    %10 = vector.multi_reduction <add>, %9, %cst_6 [1] : vector<8x128xf32> to vector<8xf32>
    %11 = vector.shape_cast %10 : vector<8xf32> to vector<8x1xf32>
    %12 = arith.mulf %3, %3 : vector<8x128xf32>
    %cst_7 = arith.constant dense<0.000000e+00> : vector<8xf32>
    %13 = vector.multi_reduction <add>, %12, %cst_7 [1] : vector<8x128xf32> to vector<8xf32>
    %14 = vector.shape_cast %13 : vector<8xf32> to vector<8x1xf32>
    %15 = arith.mulf %4, %4 : vector<8x128xf32>
    %cst_8 = arith.constant dense<0.000000e+00> : vector<8xf32>
    %16 = vector.multi_reduction <add>, %15, %cst_8 [1] : vector<8x128xf32> to vector<8xf32>
    %17 = vector.shape_cast %16 : vector<8xf32> to vector<8x1xf32>
    %18 = arith.mulf %5, %5 : vector<8x128xf32>
    %cst_9 = arith.constant dense<0.000000e+00> : vector<8xf32>
    %19 = vector.multi_reduction <add>, %18, %cst_9 [1] : vector<8x128xf32> to vector<8xf32>
    %20 = vector.shape_cast %19 : vector<8xf32> to vector<8x1xf32>
    %cst_10 = arith.constant 9.99999993E-9 : f32
    %cst_11 = arith.constant 9.99999993E-9 : f32
    %21 = arith.mulf %cst_10, %cst_11 : f32
    %22 = vector.broadcast %21 : f32 to vector<8x1xf32>
    %23 = arith.maximumf %14, %22 : vector<8x1xf32>
    %24 = math.rsqrt %23 : vector<8x1xf32>
    %25 = vector.broadcast %21 : f32 to vector<8x1xf32>
    %26 = arith.maximumf %17, %25 : vector<8x1xf32>
    %27 = math.rsqrt %26 : vector<8x1xf32>
    %28 = vector.broadcast %21 : f32 to vector<8x1xf32>
    %29 = arith.maximumf %20, %28 : vector<8x1xf32>
    %30 = math.rsqrt %29 : vector<8x1xf32>
    %31 = arith.mulf %24, %30 : vector<8x1xf32>
    %32 = arith.mulf %8, %31 : vector<8x1xf32>
    %33 = arith.mulf %27, %30 : vector<8x1xf32>
    %34 = arith.mulf %11, %33 : vector<8x1xf32>
    %c0_12 = arith.constant 0 : index
    %c0_13 = arith.constant 0 : index
    %35 = memref.load %arg2[%c0_12, %c0_13] : memref<1x1xf32, #tpu.memory_space<smem>>
    %36 = vector.broadcast %35 : f32 to vector<8x1xf32>
    %37 = arith.subf %36, %32 : vector<8x1xf32>
    %38 = arith.addf %37, %34 : vector<8x1xf32>
    %cst_14 = arith.constant 9.99999997E-7 : f32
    %39 = vector.broadcast %cst_14 : f32 to vector<8x1xf32>
    %40 = arith.maximumf %38, %39 : vector<8x1xf32>
    %c0_15 = arith.constant 0 : index
    %c0_16 = arith.constant 0 : index
    %41 = vector.load %arg7[%c0_15, %c0_16] : memref<8x1xf32, #tpu.memory_space<vmem>>, vector<8x1xf32>
    %42 = arith.addf %41, %40 : vector<8x1xf32>
    %c0_17 = arith.constant 0 : index
    %c0_18 = arith.constant 0 : index
    %43 = vector.load %arg7[%c0_17, %c0_18] : memref<8x1xf32, #tpu.memory_space<vmem>>, vector<8x1xf32>
    tpu.vector_store %arg7[%c0_17, %c0_18], %42 {strides = array<i32>} : memref<8x1xf32, #tpu.memory_space<vmem>>, vector<8x1xf32>,
    %c0_i32_19 = arith.constant 0 : i32
    %44 = arith.cmpi eq, %arg1, %c0_i32_19 : i32
    %45 = arith.extui %44 : i1 to i32
    %c0_i32_20 = arith.constant 0 : i32
    %46 = arith.cmpi ne, %45, %c0_i32_20 : i32
    scf.if %46 {
      %c0_21 = arith.constant 0 : index
      %c0_22 = arith.constant 0 : index
      %47 = vector.load %arg7[%c0_21, %c0_22] : memref<8x1xf32, #tpu.memory_space<vmem>>, vector<8x1xf32>
      %48 = vector.shape_cast %47 : vector<8x1xf32> to vector<1x8x1xf32>
      %cst_23 = arith.constant dense<0.000000e+00> : vector<1xf32>
      %49 = vector.multi_reduction <add>, %48, %cst_23 [1, 2] : vector<1x8x1xf32> to vector<1xf32>
      %50 = vector.shape_cast %49 : vector<1xf32> to vector<1x1x1xf32>
      %51 = vector.extract %50[0, 0, 0] : f32 from vector<1x1x1xf32>
      %52 = vector.broadcast %51 : f32 to vector<1x8x128xf32>
      %c0_24 = arith.constant 0 : index
      %c0_25 = arith.constant 0 : index
      %c0_26 = arith.constant 0 : index
      %53 = vector.load %arg6[%c0_24, %c0_25, %c0_26] : memref<1x8x128xf32, #tpu.memory_space<vmem>>, vector<1x8x128xf32>
      tpu.vector_store %arg6[%c0_24, %c0_25, %c0_26], %52 {strides = array<i32>} : memref<1x8x128xf32, #tpu.memory_space<vmem>>, vector<1x8x128xf32>,
    } else {
    }
    return
  }
  func.func @transform_0(%arg0: i32, %arg1: i32) -> (i32, i32) {
    %c0_i32 = arith.constant 0 : i32
    %c0_i32_0 = arith.constant 0 : i32
    %c0_i32_1 = arith.constant 0 : i32
    return %c0_i32, %c0_i32_0 : i32, i32
  }
  func.func @transform_1(%arg0: i32, %arg1: i32) -> (i32, i32) {
    %c1_i32 = arith.constant 1 : i32
    %0 = arith.muli %arg0, %c1_i32 : i32
    %1 = arith.addi %0, %arg1 : i32
    %c0_i32 = arith.constant 0 : i32
    %c0_i32_0 = arith.constant 0 : i32
    return %1, %c0_i32 : i32, i32
  }
  func.func @transform_2(%arg0: i32, %arg1: i32) -> (i32, i32) {
    %c1_i32 = arith.constant 1 : i32
    %0 = arith.muli %arg0, %c1_i32 : i32
    %1 = arith.addi %0, %arg1 : i32
    %c0_i32 = arith.constant 0 : i32
    %c0_i32_0 = arith.constant 0 : i32
    return %1, %c0_i32 : i32, i32
  }
  func.func @transform_3(%arg0: i32, %arg1: i32) -> (i32, i32) {
    %c1_i32 = arith.constant 1 : i32
    %0 = arith.muli %arg0, %c1_i32 : i32
    %1 = arith.addi %0, %arg1 : i32
    %c0_i32 = arith.constant 0 : i32
    %c0_i32_0 = arith.constant 0 : i32
    return %1, %c0_i32 : i32, i32
  }
  func.func @transform_4(%arg0: i32, %arg1: i32) -> (i32, i32, i32) {
    %c0_i32 = arith.constant 0 : i32
    %c0_i32_0 = arith.constant 0 : i32
    %c0_i32_1 = arith.constant 0 : i32
    return %arg0, %c0_i32, %c0_i32_0 : i32, i32, i32
  }
}

</mosaic_0001>

<llo_original>
// kernel: tpu_custom_call.1
$region0: #{tpu_custom_call.1}
  #allocation0 [shape = 'u32[]', space=smem, size = 0x4, offset = 0x4, fixed_abs, tag = 'smem constant byte address 0x4 - core index']
  #allocation1 [shape = 'u32[144,128]{1,0:T(1,128)}', space=vmem, size = 0x12000, scoped, tag = 'internal scratch']
  #allocation2 [shape = 'f32[8,1]{1,0:T(8,128)}', space=vmem, size = 0x1000, scoped, tag = 'scratch operand']
  #allocation3 [shape = 'f32[1,1]{1,0:T(1,128)S(6)}', space=smem, size = 0x200, scoped, tag = 'scoped memory for tpu_custom_call.1']
  %s0 = inlined_call_operand.<no memory space> [shape: f32[1,1], index: 0, kind: input, shape index: {}]
  %s1 = inlined_call_operand.hbm [shape: f32[8,128], index: 1, kind: input, shape index: {}]
  %s2 = inlined_call_operand.hbm [shape: f32[8,128], index: 2, kind: input, shape index: {}]
  %s3 = inlined_call_operand.hbm [shape: f32[8,128], index: 3, kind: input, shape index: {}]
  %s4 = inlined_call_operand.hbm [shape: f32[1,8,128], index: 4, kind: output, shape index: {}]
  %s5 = sld [smem:[#allocation0]]
  $region46: #{tpu_custom_call.1} parent=0
    _
  %s7 = ssub.s32 1, %s5
  %s8 = scalar_select 0, %s7, %s5
  %9 = sst [smem:[#allocation3]] %s0
  $region1: #{tpu_custom_call.1} parent=0
    #allocation4 [shape = 'u8[4096]{0}', space=vmem, size = 0x1000, scoped, tag = 'input window, operand 1, single buffered']
    #allocation5 [shape = 's32[1]{0}', space=sflag, size = 0x4, scoped, tag = 'scoped memory for tpu_custom_call.1']
    #allocation6 [shape = 's32[1]{0}', space=sflag, size = 0x4, scoped, tag = 'scoped memory for tpu_custom_call.1']
    #allocation7 [shape = 'u8[4096]{0}', space=vmem, size = 0x1000, scoped, tag = 'input window, operand 2, single buffered']
    #allocation8 [shape = 's32[1]{0}', space=sflag, size = 0x4, scoped, tag = 'scoped memory for tpu_custom_call.1']
    #allocation9 [shape = 'u8[4096]{0}', space=vmem, size = 0x1000, scoped, tag = 'input window, operand 3, single buffered']
    #allocation10 [shape = 'u8[4096]{0}', space=vmem, size = 0x1000, scoped, tag = 'output window, operand 0, single buffered']
    %10 = vsyncpa [#allocation5], 0
    %11 = vsyncpa [#allocation8], 0
    %12 = vsyncpa [#allocation6], 0
    // Predicated region
    $region2: #{tpu_custom_call.1} parent=1 // pred_check
      _
    $region3: #{tpu_custom_call.1} parent=1 // pred_check_branch
      %14 = sbr.rel (0) target = $region5
    $region4: #{tpu_custom_call.1} parent=1 // pred_region
      _
    $region5: #{tpu_custom_call.1} parent=1 // pred_fallthru
      _
    // Predicated region
    $region6: #{tpu_custom_call.1} parent=1 // pred_check
      _
    $region7: #{tpu_custom_call.1} parent=1 // pred_check_branch
      %16 = sbr.rel (0) target = $region9
    $region8: #{tpu_custom_call.1} parent=1 // pred_region
      %s17 = sadd.s32 0, 0
      %s19 = ssub.s32 128, 128
      %20 = vsyncadd [#allocation5], %s19
      %s21 = smul.addr %s17, 128
      %s22 = scalar_lea.hbm %s1, %s21
      %s24 = sshll.u32 [#allocation4], 4
      %s25 = int_to_ptr.vmem [resolvable:$true] %s24
      %27 = dma.hbm_to_vmem [thread:$0]  %s22, 128, %s25, [#allocation5]
    $region9: #{tpu_custom_call.1} parent=1 // pred_fallthru
      _
    // Predicated region
    $region10: #{tpu_custom_call.1} parent=1 // pred_check
      _
    $region11: #{tpu_custom_call.1} parent=1 // pred_check_branch
      %29 = sbr.rel (0) target = $region13
    $region12: #{tpu_custom_call.1} parent=1 // pred_region
      %s30 = sadd.s32 0, 0
      %s32 = ssub.s32 128, 128
      %33 = vsyncadd [#allocation8], %s32
      %s34 = smul.addr %s30, 128
      %s35 = scalar_lea.hbm %s2, %s34
      %s37 = sshll.u32 [#allocation7], 4
      %s38 = int_to_ptr.vmem [resolvable:$true] %s37
      %40 = dma.hbm_to_vmem [thread:$0]  %s35, 128, %s38, [#allocation8]
    $region13: #{tpu_custom_call.1} parent=1 // pred_fallthru
      _
    // Predicated region
    $region14: #{tpu_custom_call.1} parent=1 // pred_check
      _
    $region15: #{tpu_custom_call.1} parent=1 // pred_check_branch
      %42 = sbr.rel (0) target = $region17
    $region16: #{tpu_custom_call.1} parent=1 // pred_region
      %s43 = sadd.s32 0, 0
      %s45 = ssub.s32 128, 128
      %46 = vsyncadd [#allocation8], %s45
      %s47 = smul.addr %s43, 128
      %s48 = scalar_lea.hbm %s3, %s47
      %s50 = sshll.u32 [#allocation9], 4
      %s51 = int_to_ptr.vmem [resolvable:$true] %s50
      %53 = dma.hbm_to_vmem [thread:$0]  %s48, 128, %s51, [#allocation8]
    $region17: #{tpu_custom_call.1} parent=1 // pred_fallthru
      _
    // Predicated region
    $region18: #{tpu_custom_call.1} parent=1 // pred_check
      _
    $region19: #{tpu_custom_call.1} parent=1 // pred_check_branch
      %55 = sbr.rel (0) target = $region21
    $region20: #{tpu_custom_call.1} parent=1 // pred_region
      %56 = dma.done [#allocation5], 128
    $region21: #{tpu_custom_call.1} parent=1 // pred_fallthru
      _
    // Predicated region
    $region22: #{tpu_custom_call.1} parent=1 // pred_check
      _
    $region23: #{tpu_custom_call.1} parent=1 // pred_check_branch
      %58 = sbr.rel (0) target = $region25
    $region24: #{tpu_custom_call.1} parent=1 // pred_region
      %59 = dma.done [#allocation8], 128
    $region25: #{tpu_custom_call.1} parent=1 // pred_fallthru
      _
    // Predicated region
    $region26: #{tpu_custom_call.1} parent=1 // pred_check
      _
    $region27: #{tpu_custom_call.1} parent=1 // pred_check_branch
      %61 = sbr.rel (0) target = $region29
    $region28: #{tpu_custom_call.1} parent=1 // pred_region
      %62 = dma.done [#allocation8], 128
    $region29: #{tpu_custom_call.1} parent=1 // pred_fallthru
      _
    %s63 = sadd.s32 0, 0
    %s64 = sadd.s32 0, 0
    %s65 = sadd.s32 0, 0
    %p66 = scmp.eq.s32.totalorder 0, 0
    // Predicated region
    $region30: #{tpu_custom_call.1} parent=1 // pred_check
      %p67 = pneg %p66
    $region31: #{tpu_custom_call.1} parent=1 // pred_check_branch
      %69 = sbr.rel (%p67) target = $region33
    $region32: #{tpu_custom_call.1} parent=1 // pred_region
      %vm70 = vcmask 7168
      %71 = vst.msk [vmem:[#allocation2] sm:$0xff] %vm70, 0.0
    $region33: #{tpu_custom_call.1} parent=1 // pred_fallthru
      _
    %v72 = vld [vmem:[#allocation4] sm:$0xff]
    %v73 = vld [vmem:[#allocation7] sm:$0xff]
    %v74 = vld [vmem:[#allocation9] sm:$0xff]
    %v75 = vmul.f32 %v72, %v74
    %76 = vadd.xlane.f32.xlu0 %v75
    %v77 = vpop.xlane.xlu0 %76
    %v78 = vmul.f32 %v73, %v74
    %79 = vadd.xlane.f32.xlu0 %v78
    %v80 = vpop.xlane.xlu0 %79
    %v81 = vmul.f32 %v72, %v72
    %82 = vadd.xlane.f32.xlu0 %v81
    %v83 = vpop.xlane.xlu0 %82
    %v84 = vmul.f32 %v73, %v73
    %85 = vadd.xlane.f32.xlu0 %v84
    %v86 = vpop.xlane.xlu0 %85
    %v87 = vmul.f32 %v74, %v74
    %88 = vadd.xlane.f32.xlu0 %v87
    %v89 = vpop.xlane.xlu0 %88
    %v90 = vmax.f32 %v83, 1e-16
    %v91 = vrsqrt.pop %v90
    %v92 = vmax.f32 %v86, 1e-16
    %v93 = vrsqrt.pop %v92
    %v94 = vmax.f32 %v89, 1e-16
    %v95 = vrsqrt.pop %v94
    %v96 = vmul.f32 %v91, %v95
    %v97 = vmul.f32 %v77, %v96
    %v98 = vmul.f32 %v93, %v95
    %v99 = vmul.f32 %v80, %v98
    %s100 = sld [smem:[#allocation3]]
    %v101 = vstv %s100
    %v102 = vsub.f32 %v101, %v97
    %v103 = vadd.f32 %v102, %v99
    %v104 = vmax.f32 %v103, 1e-06
    %v105 = vld [vmem:[#allocation2] sm:$0xff]
    %v106 = vadd.f32 %v105, %v104
    %vm107 = vcmask 7168
    %108 = vst.msk [vmem:[#allocation2] sm:$0xff] %vm107, %v106
    // Predicated region
    $region34: #{tpu_custom_call.1} parent=1 // pred_check
      %p109 = pneg %p66
    $region35: #{tpu_custom_call.1} parent=1 // pred_check_branch
      %111 = sbr.rel (%p109) target = $region37
    $region36: #{tpu_custom_call.1} parent=1 // pred_region
      %v112 = vld [vmem:[#allocation2] sm:$0xff]
      %v113 = vsel %vm107, %v112, 0.0
      %114 = vadd.xlane.f32.xlu0 %v113
      %v115 = vpop.xlane.xlu0 %114
      %v116 = vrot.slane %v115, 4
      %v117 = vadd.f32 %v115, %v116
      %v118 = vrot.slane %v117, 2
      %v119 = vadd.f32 %v117, %v118
      %v120 = vrot.slane %v119, 1
      %v121 = vadd.f32 %v119, %v120
      %s122 = vtos %v121
      %v123 = vstv %s122
      %124 = vst [vmem:[#allocation10] sm:$0xff] %v123
    $region37: #{tpu_custom_call.1} parent=1 // pred_fallthru
      _
    // Predicated region
    $region38: #{tpu_custom_call.1} parent=1 // pred_check
      _
    $region39: #{tpu_custom_call.1} parent=1 // pred_check_branch
      %126 = sbr.rel (0) target = $region41
    $region40: #{tpu_custom_call.1} parent=1 // pred_region
      %s128 = ssub.s32 128, 128
      %129 = vsyncadd [#allocation6], %s128
      %s131 = sshll.u32 [#allocation10], 4
      %s132 = int_to_ptr.vmem [resolvable:$true] %s131
      %134 = dma.vmem_to_hbm [thread:$0]  %s132, 128, %s4, [#allocation6]
    $region41: #{tpu_custom_call.1} parent=1 // pred_fallthru
      _
    // Predicated region
    $region42: #{tpu_custom_call.1} parent=1 // pred_check
      _
    $region43: #{tpu_custom_call.1} parent=1 // pred_check_branch
      %136 = sbr.rel (0) target = $region45
    $region44: #{tpu_custom_call.1} parent=1 // pred_region
      %137 = dma.done [#allocation6], 128
    $region45: #{tpu_custom_call.1} parent=1 // pred_fallthru
      _
    %138 = vsyncpa [#allocation5], 1
    %139 = vsyncpa [#allocation8], 1
    %140 = vsyncpa [#allocation6], 1

</llo_original>
